<compile_context>
chip_gen: v7x
topology: tpu7x:2x2x1
jax: 0.10.0
libtpu: 0.0.40
codegen_flags: <defaults>
</compile_context>

<pallas_src>
import functools

import jax
import jax.numpy as jnp
from jax.experimental import pallas as pl
from jax.experimental.pallas import tpu as pltpu


def _v_fc_kernel(x_ref, w1_ref, w2_ref, c_ref, o_ref):
    # Packed constants: row 0 = b1, row 1 = b2, row 2 = wv (row), row 3 = bv bcast.
    b1 = c_ref[0:1, :]          # (1, H)
    b2 = c_ref[1:2, :]          # (1, H)
    wv = c_ref[2:3, :]          # (1, H)
    bv = c_ref[3:4, 0:1]        # (1, 1)

    # fc1 + relu  (bf16 MXU inputs, f32 accumulation)
    xb = x_ref[...].astype(jnp.bfloat16)
    h1 = jnp.dot(xb, w1_ref[...], preferred_element_type=jnp.float32)
    h1 = jnp.maximum(h1 + b1, 0.0)

    # fc2 + relu
    h2 = jnp.dot(h1.astype(jnp.bfloat16), w2_ref[...],
                 preferred_element_type=jnp.float32)
    h2 = jnp.maximum(h2 + b2, 0.0)

    # value head (64 -> 1): VPU multiply + XLU lane reduction, written as a
    # lane-dense (1, TB) row (the tiny sublane->lane relayout of TB scalars is
    # far cheaper than an N=1 MXU pass or a lane-width-1 masked store).
    v = jnp.sum(h2 * wv, axis=-1)            # (TB,)
    o_ref[...] = v[None, :] + bv             # (1, TB)


@functools.partial(jax.jit, static_argnames=("block_b",))
def v_fc_forward(x, params, *, block_b=1024):
    """Forward pass of V_FC. x: (B, state_size) f32. Returns (B,) f32."""
    assert block_b % 128 == 0, "batch tile must be lane-aligned"
    w1, b1, w2, b2, wv, bv = params
    B, S = x.shape
    H = w1.shape[1]

    # Pack the tiny constant tensors into one resident VMEM slab.
    consts = jnp.concatenate(
        [b1.reshape(1, H), b2.reshape(1, H), wv.reshape(1, H),
         jnp.broadcast_to(bv.reshape(1, 1), (1, H))],
        axis=0).astype(jnp.float32)                     # (4, H)

    # Weights cast to bf16 once (resident in VMEM across all grid steps).
    w1b = w1.astype(jnp.bfloat16)
    w2b = w2.astype(jnp.bfloat16)

    # Batch tiling: one sublane-aligned tile for small B, lane-aligned big tiles
    # otherwise (big tiles amortize the ~0.35us per-grid-step overhead).
    if B <= block_b:
        tb = max(8, ((B + 7) // 8) * 8)     # sublane-aligned single tile
    else:
        tb = block_b                        # multiple of 128 -> lane-dense out blocks
    b_pad = ((B + tb - 1) // tb) * tb
    if b_pad != B:
        x = jnp.pad(x, ((0, b_pad - B), (0, 0)))
    n_tiles = b_pad // tb

    out = pl.pallas_call(
        _v_fc_kernel,
        out_shape=jax.ShapeDtypeStruct((1, b_pad), jnp.float32),
        grid_spec=pltpu.PrefetchScalarGridSpec(
            num_scalar_prefetch=0,
            grid=(n_tiles,),
            in_specs=[
                pl.BlockSpec((tb, S), lambda i: (i, 0)),   # x tile   (pipelined)
                pl.BlockSpec((S, H), lambda i: (0, 0)),    # w1       (resident)
                pl.BlockSpec((H, H), lambda i: (0, 0)),    # w2       (resident)
                pl.BlockSpec((4, H), lambda i: (0, 0)),    # consts   (resident)
            ],
            out_specs=pl.BlockSpec((1, tb), lambda i: (0, i)),  # lane-dense out
        ),
        compiler_params=pltpu.CompilerParams(
            dimension_semantics=("parallel",),
        ),
    )(x, w1b, w2b, consts)

    # .view(-1) in the torch module; drop batch padding.
    return out.reshape(-1)[:B]


def init_params(key, state_size, hidden=64):
    """Deterministic init matching torch.nn.Linear (uniform +-1/sqrt(fan_in))."""
    k1, k2, k3, k4, k5, k6 = jax.random.split(key, 6)

    def u(k, shape, fan_in):
        bound = 1.0 / jnp.sqrt(jnp.float32(fan_in))
        return jax.random.uniform(k, shape, jnp.float32, -bound, bound)

    # Stored transposed: (in, out) so the kernel computes y = x @ W + b.
    w1 = u(k1, (state_size, hidden), state_size)
    b1 = u(k2, (1, hidden), state_size)
    w2 = u(k3, (hidden, hidden), hidden)
    b2 = u(k4, (1, hidden), hidden)
    wv = u(k5, (1, hidden), hidden)      # value-head weights as a row
    bv = u(k6, (1, 1), hidden)
    return (w1, b1, w2, b2, wv, bv)


def v_fc_reference(x, params):
    """Pure-JAX reference mirroring the kernel's bf16-input / f32-accumulate math."""
    w1, b1, w2, b2, wv, bv = params
    f = lambda a: a.astype(jnp.bfloat16).astype(jnp.float32)
    h1 = jnp.maximum(f(x) @ f(w1) + b1.reshape(1, -1), 0.0)
    h2 = jnp.maximum(f(h1) @ f(w2) + b2.reshape(1, -1), 0.0)
    return jnp.sum(h2 * wv.reshape(1, -1), axis=-1) + bv.reshape(())


if __name__ == "__main__":
    key = jax.random.PRNGKey(0)
    kx, kp, kx2 = jax.random.split(key, 3)

    state_size = 8
    params = init_params(kp, state_size)

    # Small latency-style batch (single tile, exercises padding to 8 sublanes).
    batch = 8
    x = jax.random.normal(kx, (batch, state_size), jnp.float32)
    values = jax.block_until_ready(v_fc_forward(x, params))
    ref = v_fc_reference(x, params)
    assert values.shape == (batch,)
    assert jnp.allclose(values, ref, atol=1e-3, rtol=1e-3)

    # Larger ragged batch exercising the multi-tile pipelined grid path.
    big_batch = 300
    x_big = jax.random.normal(kx2, (big_batch, state_size), jnp.float32)
    values_big = jax.block_until_ready(v_fc_forward(x_big, params, block_b=128))
    ref_big = v_fc_reference(x_big, params)
    assert values_big.shape == (big_batch,)
    assert jnp.allclose(values_big, ref_big, atol=1e-3, rtol=1e-3)

    print("KERNEL_OK")
</pallas_src>

<mosaic_0001>
module attributes {stable_mosaic.version = 11 : i64} {
  func.func @_v_fc_kernel(%arg0: i32, %arg1: memref<8x8xf32, #tpu.memory_space<vmem>>, %arg2: memref<8x64xbf16, #tpu.memory_space<vmem>>, %arg3: memref<64x64xbf16, #tpu.memory_space<vmem>>, %arg4: memref<4x64xf32, #tpu.memory_space<vmem>>, %arg5: memref<1x8xf32, #tpu.memory_space<vmem>>) attributes {dimension_semantics = [#tpu.dimension_semantics<parallel>], iteration_bounds = array<i64: 1>, scalar_prefetch = 0 : i64, scratch_operands = 0 : i64, tpu.core_type = #tpu.core_type<tc>, window_params = [{transform_indices = @transform_0, window_bounds = array<i64: 8, 8>}, {pipeline_mode = #tpu.pipeline_mode<synchronous>, transform_indices = @transform_1, window_bounds = array<i64: 8, 64>}, {pipeline_mode = #tpu.pipeline_mode<synchronous>, transform_indices = @transform_2, window_bounds = array<i64: 64, 64>}, {pipeline_mode = #tpu.pipeline_mode<synchronous>, transform_indices = @transform_3, window_bounds = array<i64: 4, 64>}, {transform_indices = @transform_4, window_bounds = array<i64: 1, 8>}]} {
    %c0 = arith.constant 0 : index
    %c0_0 = arith.constant 0 : index
    %0 = vector.load %arg4[%c0, %c0_0] : memref<4x64xf32, #tpu.memory_space<vmem>>, vector<1x64xf32>
    %c1 = arith.constant 1 : index
    %c0_1 = arith.constant 0 : index
    %1 = vector.load %arg4[%c1, %c0_1] : memref<4x64xf32, #tpu.memory_space<vmem>>, vector<1x64xf32>
    %c2 = arith.constant 2 : index
    %c0_2 = arith.constant 0 : index
    %2 = vector.load %arg4[%c2, %c0_2] : memref<4x64xf32, #tpu.memory_space<vmem>>, vector<1x64xf32>
    %c3 = arith.constant 3 : index
    %c0_3 = arith.constant 0 : index
    %3 = vector.load %arg4[%c3, %c0_3] : memref<4x64xf32, #tpu.memory_space<vmem>>, vector<1x1xf32>
    %c0_4 = arith.constant 0 : index
    %c0_5 = arith.constant 0 : index
    %4 = vector.load %arg1[%c0_4, %c0_5] : memref<8x8xf32, #tpu.memory_space<vmem>>, vector<8x8xf32>
    %5 = arith.truncf %4 : vector<8x8xf32> to vector<8x8xbf16>
    %c0_6 = arith.constant 0 : index
    %c0_7 = arith.constant 0 : index
    %6 = vector.load %arg2[%c0_6, %c0_7] : memref<8x64xbf16, #tpu.memory_space<vmem>>, vector<8x64xbf16>
    %cst = arith.constant dense<0.000000e+00> : vector<8x64xf32>
    %7 = tpu.matmul %5, %6, %cst {dimension_numbers = #tpu.dot_dimension_numbers<[1], [0], [0], [1], [0, 0, 1, 1], [], []>} : vector<8x8xbf16>, vector<8x64xbf16>, vector<8x64xf32> -> vector<8x64xf32>
    %8 = vector.broadcast %0 : vector<1x64xf32> to vector<8x64xf32>
    %9 = arith.addf %7, %8 : vector<8x64xf32>
    %cst_8 = arith.constant 0.000000e+00 : f32
    %10 = vector.broadcast %cst_8 : f32 to vector<8x64xf32>
    %11 = arith.maximumf %9, %10 : vector<8x64xf32>
    %12 = arith.truncf %11 : vector<8x64xf32> to vector<8x64xbf16>
    %c0_9 = arith.constant 0 : index
    %c0_10 = arith.constant 0 : index
    %13 = vector.load %arg3[%c0_9, %c0_10] : memref<64x64xbf16, #tpu.memory_space<vmem>>, vector<64x64xbf16>
    %cst_11 = arith.constant dense<0.000000e+00> : vector<8x64xf32>
    %14 = tpu.matmul %12, %13, %cst_11 {dimension_numbers = #tpu.dot_dimension_numbers<[1], [0], [0], [1], [0, 0, 1, 1], [], []>} : vector<8x64xbf16>, vector<64x64xbf16>, vector<8x64xf32> -> vector<8x64xf32>
    %15 = vector.broadcast %1 : vector<1x64xf32> to vector<8x64xf32>
    %16 = arith.addf %14, %15 : vector<8x64xf32>
    %cst_12 = arith.constant 0.000000e+00 : f32
    %17 = vector.broadcast %cst_12 : f32 to vector<8x64xf32>
    %18 = arith.maximumf %16, %17 : vector<8x64xf32>
    %19 = vector.broadcast %2 : vector<1x64xf32> to vector<8x64xf32>
    %20 = arith.mulf %18, %19 : vector<8x64xf32>
    %cst_13 = arith.constant dense<0.000000e+00> : vector<8xf32>
    %21 = vector.multi_reduction <add>, %20, %cst_13 [1] : vector<8x64xf32> to vector<8xf32>
    %22 = vector.shape_cast %21 : vector<8xf32> to vector<1x8xf32>
    %23 = vector.broadcast %3 : vector<1x1xf32> to vector<1x8xf32>
    %24 = arith.addf %22, %23 : vector<1x8xf32>
    %c0_14 = arith.constant 0 : index
    %c0_15 = arith.constant 0 : index
    %25 = vector.load %arg5[%c0_14, %c0_15] : memref<1x8xf32, #tpu.memory_space<vmem>>, vector<1x8xf32>
    tpu.vector_store %arg5[%c0_14, %c0_15], %24 {strides = array<i32>} : memref<1x8xf32, #tpu.memory_space<vmem>>, vector<1x8xf32>,
    return
  }
  func.func @transform_0(%arg0: i32) -> (i32, i32) {
    %c0_i32 = arith.constant 0 : i32
    %c0_i32_0 = arith.constant 0 : i32
    return %arg0, %c0_i32 : i32, i32
  }
  func.func @transform_1(%arg0: i32) -> (i32, i32) {
    %c0_i32 = arith.constant 0 : i32
    %c0_i32_0 = arith.constant 0 : i32
    %c0_i32_1 = arith.constant 0 : i32
    return %c0_i32, %c0_i32_0 : i32, i32
  }
  func.func @transform_2(%arg0: i32) -> (i32, i32) {
    %c0_i32 = arith.constant 0 : i32
    %c0_i32_0 = arith.constant 0 : i32
    %c0_i32_1 = arith.constant 0 : i32
    return %c0_i32, %c0_i32_0 : i32, i32
  }
  func.func @transform_3(%arg0: i32) -> (i32, i32) {
    %c0_i32 = arith.constant 0 : i32
    %c0_i32_0 = arith.constant 0 : i32
    %c0_i32_1 = arith.constant 0 : i32
    return %c0_i32, %c0_i32_0 : i32, i32
  }
  func.func @transform_4(%arg0: i32) -> (i32, i32) {
    %c0_i32 = arith.constant 0 : i32
    %c0_i32_0 = arith.constant 0 : i32
    return %c0_i32, %arg0 : i32, i32
  }
}

</mosaic_0001>

<llo_original>
// kernel: v_fc_forward.1
$region0: #{v_fc_forward.1}
  #allocation0 [shape = 'u32[]', space=smem, size = 0x4, offset = 0x4, fixed_abs, tag = 'smem constant byte address 0x4 - core index']
  #allocation1 [shape = 'u32[144,128]{1,0:T(1,128)}', space=vmem, size = 0x12000, scoped, tag = 'internal scratch']
  %s0 = inlined_call_operand.vmem [shape: f32[8,8], index: 0, kind: input, shape index: {}]
  %s1 = inlined_call_operand.vmem [shape: bf16[8,64], index: 1, kind: input, shape index: {}]
  %s2 = inlined_call_operand.vmem [shape: bf16[64,64], index: 2, kind: input, shape index: {}]
  %s3 = inlined_call_operand.vmem [shape: f32[4,64], index: 3, kind: input, shape index: {}]
  %s4 = inlined_call_operand.hbm [shape: f32[1,8], index: 4, kind: output, shape index: {}]
  %s5 = sld [smem:[#allocation0]]
  $region26: #{v_fc_forward.1} parent=0
    _
  %s7 = ssub.s32 1, %s5
  %s8 = scalar_select 0, %s7, %s5
  $region1: #{v_fc_forward.1} parent=0
    #allocation2 [shape = 'u8[512]{0}', space=vmem, size = 0x400, scoped, tag = 'output window, operand 0, single buffered']
    #allocation3 [shape = 's32[1]{0}', space=sflag, size = 0x4, scoped, tag = 'scoped memory for v_fc_forward.1']
    %9 = vsyncpa [#allocation3], 0
    // Predicated region
    $region2: #{v_fc_forward.1} parent=1 // pred_check
      _
    $region3: #{v_fc_forward.1} parent=1 // pred_check_branch
      %11 = sbr.rel (0) target = $region5
    $region4: #{v_fc_forward.1} parent=1 // pred_region
      _
    $region5: #{v_fc_forward.1} parent=1 // pred_fallthru
      _
    // Predicated region
    $region6: #{v_fc_forward.1} parent=1 // pred_check
      _
    $region7: #{v_fc_forward.1} parent=1 // pred_check_branch
      %13 = sbr.rel (0) target = $region9
    $region8: #{v_fc_forward.1} parent=1 // pred_region
      _
    $region9: #{v_fc_forward.1} parent=1 // pred_fallthru
      _
    // Predicated region
    $region10: #{v_fc_forward.1} parent=1 // pred_check
      _
    $region11: #{v_fc_forward.1} parent=1 // pred_check_branch
      %15 = sbr.rel (0) target = $region13
    $region12: #{v_fc_forward.1} parent=1 // pred_region
      _
    $region13: #{v_fc_forward.1} parent=1 // pred_fallthru
      _
    // Predicated region
    $region14: #{v_fc_forward.1} parent=1 // pred_check
      _
    $region15: #{v_fc_forward.1} parent=1 // pred_check_branch
      %17 = sbr.rel (0) target = $region17
    $region16: #{v_fc_forward.1} parent=1 // pred_region
      _
    $region17: #{v_fc_forward.1} parent=1 // pred_fallthru
      _
    %v19 = vld [vmem:[%s3] sm:$0x1]
    %v20 = vld [vmem:[%s3 + $0x1] sm:$0x1]
    %v21 = vld [vmem:[%s3 + $0x2] sm:$0x1]
    %v22 = vld [vmem:[%s3 + $0x3] sm:$0x1]
    %v23 = vld [vmem:[%s0] sm:$0xff]
    %v24 = vpack.c.bf16 %v23, %v23
    %v25 = vld [vmem:[%s1] sm:$0xf]
    %v26 = vlaneseq
    %v27 = vshrl.u32 %v26, 7
    %v28 = vsub.s32 0, %v27
    %v29 = vrot.slane %v19, %v28
    %vm30 = vcmask 64512
    %v32 = vsel %vm30, %v24, 0
    %vm34 = vcmask 1043456
    %v36 = vsel %vm34, %v25, 0
    %38 = vmatprep.subr.bf16.mxu0 0
    %39 = vmatpush1.bf16.msra.mxu0 %v36
    %40 = vmatprep.subr.bf16.mxu0 0
    %41 = vmatpush1.bf16.msra.mxu0 0
    %42 = vmatprep.subr.bf16.mxu0 0
    %43 = vmatpush1.bf16.msra.mxu0 0
    %44 = vmatprep.subr.bf16.mxu0 0
    %45 = vmatpush1.bf16.msra.mxu0 0
    %46 = vmatprep.subr.bf16.mxu0 0
    %47 = vmatpush1.bf16.msra.mxu0 0
    %48 = vmatprep.subr.bf16.mxu0 0
    %49 = vmatpush1.bf16.msra.mxu0 0
    %50 = vmatprep.subr.bf16.mxu0 0
    %51 = vmatpush1.bf16.msra.mxu0 0
    %52 = vmatprep.subr.bf16.mxu0 0
    %53 = vmatpush1.bf16.msra.mxu0 0
    %54 = vmatprep.subr.bf16.mxu0 0
    %55 = vmatpush1.bf16.msra.mxu0 0
    %56 = vmatprep.subr.bf16.mxu0 0
    %57 = vmatpush1.bf16.msra.mxu0 0
    %58 = vmatprep.subr.bf16.mxu0 0
    %59 = vmatpush1.bf16.msra.mxu0 0
    %60 = vmatprep.subr.bf16.mxu0 0
    %61 = vmatpush1.bf16.msra.mxu0 0
    %62 = vmatprep.subr.bf16.mxu0 0
    %63 = vmatpush1.bf16.msra.mxu0 0
    %64 = vmatprep.subr.bf16.mxu0 0
    %65 = vmatpush1.bf16.msra.mxu0 0
    %66 = vmatprep.subr.bf16.mxu0 0
    %67 = vmatpush1.bf16.msra.mxu0 0
    %68 = vmatprep.subr.bf16.mxu0 0
    %69 = vmatpush1.bf16.msra.mxu0 0
    %70 = vmatprep.mubr.bf16.mxu0 0
    %71 = vmatmul.mubr.bf16.gmra.mrb[0].mxu0 %v32
    %v72 = vpop.f32.mrb[0].mxu0
    %v73 = vadd.f32 %v29, %v72
    %v74 = vpop.f32.mrb[0].mxu0
    %v75 = vpop.f32.mrb[0].mxu0
    %v76 = vpop.f32.mrb[0].mxu0
    %77 = vdwg.mxu0
    %v78 = vmax.f32 %v73, 0.0
    %v79 = vpack.c.bf16 %v78, %v78
    %v80 = vld [vmem:[%s2] sm:$0xf]
    %v81 = vld [vmem:[%s2 + $0x4] sm:$0xf]
    %v82 = vld [vmem:[%s2 + $0x8] sm:$0xf]
    %v83 = vld [vmem:[%s2 + $0xc] sm:$0xf]
    %v84 = vld [vmem:[%s2 + $0x10] sm:$0xf]
    %v85 = vld [vmem:[%s2 + $0x14] sm:$0xf]
    %v86 = vld [vmem:[%s2 + $0x18] sm:$0xf]
    %v87 = vld [vmem:[%s2 + $0x1c] sm:$0xf]
    %v88 = vlaneseq
    %v89 = vshrl.u32 %v88, 7
    %v90 = vsub.s32 0, %v89
    %v91 = vrot.slane %v20, %v90
    %v100 = vunpack.c.l.b16 %v80
    %v101 = vunpack.c.l.b16 %v81
    %v102 = vunpack.c.l.b16 %v82
    %v103 = vunpack.c.l.b16 %v83
    %v104 = vunpack.c.l.b16 %v84
    %v105 = vunpack.c.l.b16 %v85
    %v106 = vunpack.c.l.b16 %v86
    %v107 = vunpack.c.l.b16 %v87
    %v108 = vpack.c.b16 %v101, %v100
    %v109 = vpack.c.b16 %v103, %v102
    %v110 = vpack.c.b16 %v105, %v104
    %v111 = vpack.c.b16 %v107, %v106
    %vm116 = vcmask 523264
    %v118 = vsel %vm116, %v79, 0
    %120 = vmatprep.subr.bf16.mxu0 0
    %121 = vmatpush1.bf16.msra.mxu0 %v108
    %122 = vmatprep.subr.bf16.mxu0 0
    %123 = vmatpush1.bf16.msra.mxu0 %v109
    %124 = vmatprep.subr.bf16.mxu0 0
    %125 = vmatpush1.bf16.msra.mxu0 %v110
    %126 = vmatprep.subr.bf16.mxu0 0
    %127 = vmatpush1.bf16.msra.mxu0 %v111
    %128 = vmatprep.subr.bf16.mxu0 0
    %129 = vmatpush1.bf16.msra.mxu0 0
    %130 = vmatprep.subr.bf16.mxu0 0
    %131 = vmatpush1.bf16.msra.mxu0 0
    %132 = vmatprep.subr.bf16.mxu0 0
    %133 = vmatpush1.bf16.msra.mxu0 0
    %134 = vmatprep.subr.bf16.mxu0 0
    %135 = vmatpush1.bf16.msra.mxu0 0
    %136 = vmatprep.subr.bf16.mxu0 0
    %137 = vmatpush1.bf16.msra.mxu0 0
    %138 = vmatprep.subr.bf16.mxu0 0
    %139 = vmatpush1.bf16.msra.mxu0 0
    %140 = vmatprep.subr.bf16.mxu0 0
    %141 = vmatpush1.bf16.msra.mxu0 0
    %142 = vmatprep.subr.bf16.mxu0 0
    %143 = vmatpush1.bf16.msra.mxu0 0
    %144 = vmatprep.subr.bf16.mxu0 0
    %145 = vmatpush1.bf16.msra.mxu0 0
    %146 = vmatprep.subr.bf16.mxu0 0
    %147 = vmatpush1.bf16.msra.mxu0 0
    %148 = vmatprep.subr.bf16.mxu0 0
    %149 = vmatpush1.bf16.msra.mxu0 0
    %150 = vmatprep.subr.bf16.mxu0 0
    %151 = vmatpush1.bf16.msra.mxu0 0
    %152 = vmatprep.mubr.bf16.mxu0 0
    %153 = vmatmul.mubr.bf16.gmra.mrb[0].mxu0 %v118
    %v154 = vpop.f32.mrb[0].mxu0
    %v155 = vadd.f32 %v91, %v154
    %v156 = vpop.f32.mrb[0].mxu0
    %v157 = vpop.f32.mrb[0].mxu0
    %v158 = vpop.f32.mrb[0].mxu0
    %159 = vdwg.mxu0
    %v160 = vmax.f32 %v155, 0.0
    %v161 = vlaneseq
    %v162 = vshrl.u32 %v161, 7
    %v163 = vsub.s32 0, %v162
    %v164 = vrot.slane %v21, %v163
    %v165 = vmul.f32 %v160, %v164
    %v166 = vsel %vm116, %v165, 0.0
    %167 = vadd.xlane.f32.xlu0 %v166
    %v168 = vpop.xlane.xlu0 %167
    %170 = vset.pattern.permute.xlu0 0
    %171 = vperm.xlu0 %170, %v22
    %v172 = vpop.permute.xlu0 %171
    %v173 = vlaneseq
    %v174 = vshrl.u32 %v173, 7
    %v175 = vsub.s32 0, %v174
    %v176 = vrot.slane %v172, %v175
    %v178 = vadd.f32 %v168, %v176
    %180 = vset.pattern.permute.xlu0 0
    %181 = vperm.xlu0 %180, %v178
    %v182 = vpop.permute.xlu0 %181
    %v183 = vlaneseq
    %v184 = vand.u32 %v183, 127
    %v185 = vlaneseq
    %v186 = vshrl.u32 %v185, 7
    %v187 = vsub.s32 %v184, %v186
    %v188 = vrot.slane %v182, %v187
    %vm190 = vcmask 57344
    %191 = vst.msk [vmem:[#allocation2] sm:$0x1] %vm190, %v188
    // Predicated region
    $region18: #{v_fc_forward.1} parent=1 // pred_check
      _
    $region19: #{v_fc_forward.1} parent=1 // pred_check_branch
      %193 = sbr.rel (0) target = $region21
    $region20: #{v_fc_forward.1} parent=1 // pred_region
      %s195 = ssub.s32 16, 16
      %196 = vsyncadd [#allocation3], %s195
      %s198 = sshll.u32 [#allocation2], 4
      %s199 = int_to_ptr.vmem [resolvable:$true] %s198
      %201 = dma.vmem_to_hbm [thread:$0]  %s199, 16, %s4, [#allocation3]
    $region21: #{v_fc_forward.1} parent=1 // pred_fallthru
      _
    // Predicated region
    $region22: #{v_fc_forward.1} parent=1 // pred_check
      _
    $region23: #{v_fc_forward.1} parent=1 // pred_check_branch
      %203 = sbr.rel (0) target = $region25
    $region24: #{v_fc_forward.1} parent=1 // pred_region
      %204 = dma.done [#allocation3], 16
    $region25: #{v_fc_forward.1} parent=1 // pred_fallthru
      _
    %205 = vsyncpa [#allocation3], 1

</llo_original>
